<compile_context>
chip_gen: v7x
topology: tpu7x:2x2x1
jax: 0.10.0
libtpu: 0.0.40
codegen_flags: <defaults>
</compile_context>

<pallas_src>
import functools

import numpy as np
import jax
import jax.numpy as jnp
from jax import lax
from jax.experimental import pallas as pl
from jax.experimental.pallas import tpu as pltpu

_LANE = 128
_SUBLANE = 8


def _round_up(v, m):
    return ((v + m - 1) // m) * m


def _vmem_limit_bytes():
    """Per-generation VMEM budget (~75% of physical, capped), with a v7x-safe
    fallback when the hardware cannot be queried."""
    try:
        info = pltpu.get_tpu_info()
        cap = getattr(info, "vmem_capacity_bytes", None)
        if cap:
            return int(min(cap * 3 // 4, 100 * 1024 * 1024))
    except Exception:
        pass
    return 48 * 1024 * 1024  # conservative: fits v7x's 64 MiB physical VMEM


# ---------------------------------------------------------------------------
# Selection: (B, n, n) Gram -> (2, n) gather weights.  Pure jnp/lax so the
# SAME code runs both inside the fused Pallas kernel and as the plain-JAX
# finalize step of the tiled path.
# ---------------------------------------------------------------------------
def _select_weights_from_gram(gram, *, n, k, inv_den):
    """Returns a (2, n) f32 weight matrix:
       row 0 = one_hot(i_star)             (krum column select)
       row 1 = neighbour_counts * inv_den  (mkrum mean weights)"""
    B = gram.shape[0]
    inf = jnp.float32(jnp.inf)

    # squared norms from the Gram diagonal (no extra O(B*n*D) pass over x)
    ii = lax.broadcasted_iota(jnp.int32, (1, n, n), 1)
    jj = lax.broadcasted_iota(jnp.int32, (1, n, n), 2)
    sq = jnp.sum(jnp.where(ii == jj, gram, 0.0), axis=2)            # (B, n)
    d2 = sq[:, :, None] + sq[:, None, :] - 2.0 * gram
    dist = jnp.sqrt(jnp.maximum(d2, 0.0))                           # (B, n, n)

    col3 = lax.broadcasted_iota(jnp.int32, (B, n, n), 2)

    # phase 1: per-row sum of the (k+1) smallest distances (incl. 0 self-dist)
    def body1(_, carry):
        work, scores = carry
        m = jnp.min(work, axis=2, keepdims=True)                    # (B, n, 1)
        scores = scores + m[:, :, 0]
        first = jnp.min(jnp.where(work == m, col3, n), axis=2, keepdims=True)
        work = jnp.where(col3 == first, inf, work)
        return work, scores

    _, scores = lax.fori_loop(0, k + 1, body1,
                              (dist, jnp.zeros((B, n), jnp.float32)))

    # i_star = argmin over the FLATTENED (B, n) scores (torch.argmin semantics)
    b_iota = lax.broadcasted_iota(jnp.int32, (B, n), 0)
    j_iota = lax.broadcasted_iota(jnp.int32, (B, n), 1)
    flat_idx = b_iota * n + j_iota
    min_score = jnp.min(scores)
    i_star = jnp.min(jnp.where(scores == min_score, flat_idx, B * n))

    # d_star[b, j] = dist[b, i_star, j]
    row_onehot = (lax.broadcasted_iota(jnp.int32, (1, n, 1), 1)
                  == i_star).astype(jnp.float32)
    d_star = jnp.sum(dist * row_onehot, axis=1)                     # (B, n)

    # phase 2: neighbour multiset counts accumulated over all batches
    def body2(_, carry):
        work2, counts = carry
        m = jnp.min(work2, axis=1, keepdims=True)                   # (B, 1)
        first = jnp.min(jnp.where(work2 == m, j_iota, n), axis=1, keepdims=True)
        onehot = (j_iota == first).astype(jnp.float32)              # (B, n)
        counts = counts + jnp.sum(onehot, axis=0, keepdims=True)    # (1, n)
        work2 = jnp.where(onehot > 0, inf, work2)
        return work2, counts

    _, counts = lax.fori_loop(0, k + 1, body2,
                              (d_star, jnp.zeros((1, n), jnp.float32)))

    krum_row = (lax.broadcasted_iota(jnp.int32, (1, n), 1)
                == i_star).astype(jnp.float32)                      # (1, n)
    mkrum_row = counts * jnp.float32(inv_den)                       # (1, n)
    c_iota = lax.broadcasted_iota(jnp.int32, (2, n), 0)
    return jnp.where(c_iota == 0,
                     jnp.broadcast_to(krum_row, (2, n)),
                     jnp.broadcast_to(mkrum_row, (2, n)))           # (2, n)


# ---------------------------------------------------------------------------
# Kernels
# ---------------------------------------------------------------------------
def _gram_partial_kernel(x_ref, gram_ref, *, tile_d, tiles_per_split, d_total,
                         needs_mask):
    """Pass 1: accumulate this core's partial (B, n, n) Gram over its D tiles.
    x arrives in native (B, tile_d, n) layout; ragged / overshoot tiles are
    zero-masked in-kernel (no HBM padding copy)."""
    c = pl.program_id(0)
    i = pl.program_id(1)

    @pl.when(i == 0)
    def _():
        gram_ref[...] = jnp.zeros_like(gram_ref)

    x = x_ref[...]                                   # (B, tile_d, n)
    if needs_mask:
        d0 = (c * tiles_per_split + i) * tile_d
        d_iota = lax.broadcasted_iota(jnp.int32, x.shape, 1)
        x = jnp.where(d0 + d_iota < d_total, x, jnp.zeros_like(x))
    xt = jnp.transpose(x, (0, 2, 1))                 # in-VMEM (B, n, tile_d)
    gram_ref[...] += jnp.einsum('bid,bjd->bij', xt, xt,
                                preferred_element_type=jnp.float32)


def _gather_kernel(w_ref, x_ref, out_ref):
    """Pass 2: krum/mkrum gather as one small MXU matmul per D tile, emitted
    as a single lane-packed (B, tile_d, 2) output block."""
    x = x_ref[...]                                   # (B, tile_d, n)
    B, _, n = x.shape
    w = w_ref[...].astype(x.dtype)                   # (2, n)
    wb = jnp.broadcast_to(w[None], (B, 2, n))
    out = jnp.einsum('bdn,bcn->bdc', x, wb,
                     preferred_element_type=jnp.float32)
    out_ref[...] = out.astype(out_ref.dtype)


def _fused_kernel(x_ref, out_ref, *, n, k, inv_den):
    """Single-call path: x stays VMEM-resident, so Gram + selection + gather
    read x from HBM exactly once."""
    x = x_ref[...]                                   # (B, D, n)
    B = x.shape[0]
    xt = jnp.transpose(x, (0, 2, 1))                 # in-VMEM (B, n, D)
    gram = jnp.einsum('bid,bjd->bij', xt, xt,
                      preferred_element_type=jnp.float32)
    w = _select_weights_from_gram(gram, n=n, k=k, inv_den=inv_den)  # (2, n)
    wb = jnp.broadcast_to(w[None].astype(x.dtype), (B, 2, n))
    out = jnp.einsum('bdn,bcn->bdc', x, wb,
                     preferred_element_type=jnp.float32)
    out_ref[...] = out.astype(out_ref.dtype)


# ---------------------------------------------------------------------------
# Wrapper
# ---------------------------------------------------------------------------
def _plan(B, D, n, itemsize, vmem_limit):
    """Decide fused vs tiled and pick a large tile_d (multiple of 8 sublanes,
    preferably multiples of 512, sized for double-buffering + temporaries)."""
    lane_n = _round_up(max(n, 1), _LANE)             # VMEM lane padding of n
    sub_d = _round_up(D, _SUBLANE)
    per_d = B * lane_n * itemsize                    # VMEM bytes per unit of D

    # fused: x block + f32 temps + lane-padded (B, D, 2) output block
    fused_est = sub_d * (2 * per_d + B * _LANE * (4 + itemsize))
    if fused_est <= vmem_limit // 3:
        return True, sub_d

    budget = vmem_limit // 3                         # double-buffered inputs + temps
    tile_d = budget // (2 * per_d)
    if tile_d >= 512:
        tile_d = (tile_d // 512) * 512
    else:
        tile_d = max(_SUBLANE, (tile_d // _SUBLANE) * _SUBLANE)
    tile_d = min(tile_d, sub_d)
    return False, tile_d


def get_krum(x, tile_d=None):
    """x: (B, D, n) -> (krum (B, D, 1), mkrum (B, D, 1)), like multiKrum.getKrum."""
    B, D, n = x.shape
    f = n // 2
    k = n - f - 2
    if k < 0:
        raise ValueError(f"multi-krum needs n >= 3 client vectors, got n={n}")
    inv_den = 1.0 / (B * (k + 1))
    itemsize = jnp.dtype(x.dtype).itemsize
    vmem_limit = _vmem_limit_bytes()

    if tile_d is None:
        fused, tile_d = _plan(B, D, n, itemsize, vmem_limit)
    else:
        if tile_d <= 0 or tile_d % _SUBLANE != 0:
            raise ValueError("tile_d must be a positive multiple of 8")
        fused = False

    if fused:
        out = pl.pallas_call(
            functools.partial(_fused_kernel, n=n, k=k, inv_den=inv_den),
            out_shape=jax.ShapeDtypeStruct((B, D, 2), x.dtype),
            grid=(1,),
            in_specs=[pl.BlockSpec((B, D, n), lambda i: (0, 0, 0))],
            out_specs=pl.BlockSpec((B, D, 2), lambda i: (0, 0, 0)),
            compiler_params=pltpu.CompilerParams(
                dimension_semantics=("arbitrary",),
                vmem_limit_bytes=vmem_limit),
        )(x)
        return out[:, :, 0:1], out[:, :, 1:2]

    # ------------------------------- tiled path -----------------------------
    num_tiles = pl.cdiv(D, tile_d)
    n_split = 2 if num_tiles >= 2 else 1             # v7x megacore split
    tiles_per_split = pl.cdiv(num_tiles, n_split)
    needs_mask = (n_split * tiles_per_split * tile_d != D)

    def x_index_map(c, i):
        t = jnp.minimum(c * tiles_per_split + i, num_tiles - 1)
        return (0, t, 0)

    # pass 1: per-core partial Gram accumulation over the D tiles
    gram_parts = pl.pallas_call(
        functools.partial(_gram_partial_kernel, tile_d=tile_d,
                          tiles_per_split=tiles_per_split, d_total=D,
                          needs_mask=needs_mask),
        out_shape=jax.ShapeDtypeStruct((n_split, B, n, n), jnp.float32),
        grid=(n_split, tiles_per_split),
        in_specs=[pl.BlockSpec((B, tile_d, n), x_index_map)],
        out_specs=pl.BlockSpec((None, B, n, n), lambda c, i: (c, 0, 0, 0)),
        compiler_params=pltpu.CompilerParams(
            dimension_semantics=("parallel", "arbitrary"),
            vmem_limit_bytes=vmem_limit),
    )(x)

    # finalize: tiny O(n^2) selection on the summed Gram (plain JAX)
    gram = jnp.sum(gram_parts, axis=0)
    w = _select_weights_from_gram(gram, n=n, k=k, inv_den=inv_den)  # (2, n)

    # pass 2: fused krum/mkrum gather, one lane-packed block per D tile.
    # Output is allocated padded to a multiple of tile_d so no write ever goes
    # out of bounds; the tail is sliced off in the wrapper (tiny copy).
    Dp = num_tiles * tile_d
    out = pl.pallas_call(
        _gather_kernel,
        out_shape=jax.ShapeDtypeStruct((B, Dp, 2), x.dtype),
        grid=(num_tiles,),
        in_specs=[pl.BlockSpec((2, n), lambda i: (0, 0)),
                  pl.BlockSpec((B, tile_d, n), lambda i: (0, i, 0))],
        out_specs=pl.BlockSpec((B, tile_d, 2), lambda i: (0, i, 0)),
        compiler_params=pltpu.CompilerParams(
            dimension_semantics=("parallel",),
            vmem_limit_bytes=vmem_limit),
    )(w, x)
    return out[:, :D, 0:1], out[:, :D, 1:2]


class Net:
    """JAX/Pallas port of multiKrum.Net (no learnable parameters)."""

    def __init__(self, mode='mkrum'):
        assert mode in ('krum', 'mkrum')
        self.mode = mode

    def __call__(self, x):
        krum, mkrum = get_krum(x)
        return krum if self.mode == 'krum' else mkrum


def _get_krum_ref(x):
    """Pure-JAX reference mirroring the PyTorch code (correctness check)."""
    B, D, n = x.shape
    f = n // 2
    k = n - f - 2
    xt = jnp.transpose(x, (0, 2, 1)).astype(jnp.float32)
    gram = jnp.einsum('bnd,bmd->bnm', xt, xt, precision=lax.Precision.HIGHEST)
    sq = jnp.sum(xt * xt, axis=-1)
    dist = jnp.sqrt(jnp.maximum(sq[:, :, None] + sq[:, None, :] - 2.0 * gram, 0.0))
    neg_vals, nbh = lax.top_k(-dist, k + 1)
    nbh_dist = -neg_vals
    i_star = jnp.argmin(nbh_dist.sum(2))
    krum = x[:, :, i_star][..., None]
    idxs = nbh[:, i_star, :].reshape(-1)
    mkrum = jnp.mean(x[:, :, idxs], axis=2, keepdims=True)
    return krum, mkrum


if __name__ == "__main__":
    key = jax.random.PRNGKey(0)

    # B=1: as in the PyTorch module, the flattened argmin used as a column
    # index is only well-defined for a single batch.
    B, D, n = 1, 32, 8
    base = jax.random.normal(key, (B, D, n), dtype=jnp.float32)
    # distinct per-client scales -> well-separated pairwise distances, so the
    # krum selection is insensitive to matmul precision / summation order.
    scale = 1.0 + 0.5 * jnp.arange(n, dtype=jnp.float32)
    x = base * scale[None, None, :]

    net = Net(mode='mkrum')
    out = net(x)
    jax.block_until_ready(out)
    assert out.shape == (B, D, 1)

    get_krum_jit = jax.jit(get_krum, static_argnames=("tile_d",))

    # fused single-call path
    krum, mkrum = get_krum_jit(x)
    krum_r, mkrum_r = _get_krum_ref(x)
    np.testing.assert_allclose(np.asarray(krum), np.asarray(krum_r),
                               rtol=1e-4, atol=1e-4)
    np.testing.assert_allclose(np.asarray(mkrum), np.asarray(mkrum_r),
                               rtol=1e-4, atol=1e-4)

    # tiled path: megacore-split Gram accumulation over several D tiles with a
    # ragged last tile (704 = 2*256 + 192) plus the per-tile gather kernel.
    B2, D2, n2 = 1, 704, 8
    base2 = jax.random.normal(jax.random.PRNGKey(1), (B2, D2, n2),
                              dtype=jnp.float32)
    scale2 = 1.0 + 0.5 * jnp.arange(n2, dtype=jnp.float32)
    x2 = base2 * scale2[None, None, :]
    krum2, mkrum2 = get_krum_jit(x2, tile_d=256)
    krum2_r, mkrum2_r = _get_krum_ref(x2)
    np.testing.assert_allclose(np.asarray(krum2), np.asarray(krum2_r),
                               rtol=1e-4, atol=1e-4)
    np.testing.assert_allclose(np.asarray(mkrum2), np.asarray(mkrum2_r),
                               rtol=1e-4, atol=1e-4)

    print("KERNEL_OK")
</pallas_src>

<mosaic_0001>
module attributes {stable_mosaic.version = 11 : i64} {
  func.func @_fused_kernel(%arg0: i32, %arg1: memref<1x32x8xf32, #tpu.memory_space<vmem>>, %arg2: memref<1x32x2xf32, #tpu.memory_space<vmem>>) attributes {dimension_semantics = [#tpu.dimension_semantics<arbitrary>], iteration_bounds = array<i64: 1>, scalar_prefetch = 0 : i64, scratch_operands = 0 : i64, tpu.core_type = #tpu.core_type<tc>, window_params = [{pipeline_mode = #tpu.pipeline_mode<synchronous>, transform_indices = @transform_0, window_bounds = array<i64: 1, 32, 8>}, {pipeline_mode = #tpu.pipeline_mode<synchronous>, transform_indices = @transform_1, window_bounds = array<i64: 1, 32, 2>}]} {
    %c0 = arith.constant 0 : index
    %c0_0 = arith.constant 0 : index
    %c0_1 = arith.constant 0 : index
    %0 = vector.load %arg1[%c0, %c0_0, %c0_1] : memref<1x32x8xf32, #tpu.memory_space<vmem>>, vector<1x32x8xf32>
    %1 = tpu.transpose %0, [0, 2, 1] : vector<1x32x8xf32> -> vector<1x8x32xf32>
    "tpu.trace_start"() <{level = 10 : i32, message = "bid,bjd->bij"}> : () -> ()
    %cst = arith.constant dense<0.000000e+00> : vector<1x8x8xf32>
    %2 = tpu.matmul %1, %1, %cst {dimension_numbers = #tpu.dot_dimension_numbers<[2], [2], [1], [1], [0, 0, 0, 1, 1, 1], [0], [0]>} : vector<1x8x32xf32>, vector<1x8x32xf32>, vector<1x8x8xf32> -> vector<1x8x8xf32>
    "tpu.trace_stop"() : () -> ()
    %3 = tpu.iota {dimensions = array<i32: 1>} : vector<1x8x8xi32>
    %4 = tpu.iota {dimensions = array<i32: 2>} : vector<1x8x8xi32>
    %5 = arith.cmpi eq, %3, %4 : vector<1x8x8xi32>
    %cst_2 = arith.constant 0.000000e+00 : f32
    %6 = vector.broadcast %cst_2 : f32 to vector<1x8x8xf32>
    %7 = arith.select %5, %2, %6 : vector<1x8x8xi1>, vector<1x8x8xf32>
    %cst_3 = arith.constant dense<0.000000e+00> : vector<1x8xf32>
    %8 = vector.multi_reduction <add>, %7, %cst_3 [2] : vector<1x8x8xf32> to vector<1x8xf32>
    %9 = vector.shape_cast %8 : vector<1x8xf32> to vector<1x8x1xf32>
    %10 = vector.shape_cast %8 : vector<1x8xf32> to vector<1x1x8xf32>
    %11 = vector.broadcast %9 : vector<1x8x1xf32> to vector<1x8x8xf32>
    %12 = vector.broadcast %10 : vector<1x1x8xf32> to vector<1x8x8xf32>
    %13 = arith.addf %11, %12 : vector<1x8x8xf32>
    %cst_4 = arith.constant 2.000000e+00 : f32
    %14 = vector.broadcast %cst_4 : f32 to vector<1x8x8xf32>
    %15 = arith.mulf %14, %2 : vector<1x8x8xf32>
    %16 = arith.subf %13, %15 : vector<1x8x8xf32>
    %cst_5 = arith.constant 0.000000e+00 : f32
    %17 = vector.broadcast %cst_5 : f32 to vector<1x8x8xf32>
    %18 = arith.maximumf %16, %17 : vector<1x8x8xf32>
    %19 = math.sqrt %18 : vector<1x8x8xf32>
    %20 = tpu.iota {dimensions = array<i32: 2>} : vector<1x8x8xi32>
    %cst_6 = arith.constant 0.000000e+00 : f32
    %21 = vector.broadcast %cst_6 : f32 to vector<1x8xf32>
    %cst_7 = arith.constant 0x7F800000 : f32
    %c0_i32 = arith.constant 0 : i32
    %c3_i32 = arith.constant 3 : i32
    %22 = arith.addi %c0_i32, %c3_i32 : i32
    %c1_i32 = arith.constant 1 : i32
    %23:2 = scf.for %arg3 = %c0_i32 to %22 step %c1_i32 iter_args(%arg4 = %19, %arg5 = %21) -> (vector<1x8x8xf32>, vector<1x8xf32>)  : i32 {
      %cst_23 = arith.constant dense<0x7F800000> : vector<1x8xf32>
      %70 = vector.multi_reduction <minimumf>, %arg4, %cst_23 [2] : vector<1x8x8xf32> to vector<1x8xf32>
      %71 = vector.shape_cast %70 : vector<1x8xf32> to vector<1x8x1xf32>
      %72 = vector.shape_cast %71 : vector<1x8x1xf32> to vector<1x8xf32>
      %73 = arith.addf %arg5, %72 : vector<1x8xf32>
      %74 = vector.broadcast %71 : vector<1x8x1xf32> to vector<1x8x8xf32>
      %75 = arith.cmpf oeq, %arg4, %74 : vector<1x8x8xf32>
      %c8_i32_24 = arith.constant 8 : i32
      %76 = vector.broadcast %c8_i32_24 : i32 to vector<1x8x8xi32>
      %77 = arith.select %75, %20, %76 : vector<1x8x8xi1>, vector<1x8x8xi32>
      %cst_25 = arith.constant dense<2147483647> : vector<1x8xi32>
      %78 = vector.multi_reduction <minsi>, %77, %cst_25 [2] : vector<1x8x8xi32> to vector<1x8xi32>
      %79 = vector.shape_cast %78 : vector<1x8xi32> to vector<1x8x1xi32>
      %80 = vector.broadcast %79 : vector<1x8x1xi32> to vector<1x8x8xi32>
      %81 = arith.cmpi eq, %20, %80 : vector<1x8x8xi32>
      %82 = vector.broadcast %cst_7 : f32 to vector<1x8x8xf32>
      %83 = arith.select %81, %82, %arg4 : vector<1x8x8xi1>, vector<1x8x8xf32>
      scf.yield %83, %73 : vector<1x8x8xf32>, vector<1x8xf32>
    }
    %24 = tpu.iota {dimensions = array<i32: 0>} : vector<1x8xi32>
    %25 = tpu.iota {dimensions = array<i32: 1>} : vector<1x8xi32>
    %c8_i32 = arith.constant 8 : i32
    %26 = vector.broadcast %c8_i32 : i32 to vector<1x8xi32>
    %27 = arith.muli %24, %26 : vector<1x8xi32>
    %28 = arith.addi %27, %25 : vector<1x8xi32>
    %29 = vector.shape_cast %23#1 : vector<1x8xf32> to vector<1x1x8xf32>
    %cst_8 = arith.constant dense<0x7F800000> : vector<1xf32>
    %30 = vector.multi_reduction <minimumf>, %29, %cst_8 [1, 2] : vector<1x1x8xf32> to vector<1xf32>
    %31 = vector.shape_cast %30 : vector<1xf32> to vector<1x1x1xf32>
    %32 = vector.extract %31[0, 0, 0] : f32 from vector<1x1x1xf32>
    %33 = vector.broadcast %32 : f32 to vector<1x8xf32>
    %34 = arith.cmpf oeq, %23#1, %33 : vector<1x8xf32>
    %c8_i32_9 = arith.constant 8 : i32
    %35 = vector.broadcast %c8_i32_9 : i32 to vector<1x8xi32>
    %36 = arith.select %34, %28, %35 : vector<1x8xi1>, vector<1x8xi32>
    %37 = vector.shape_cast %36 : vector<1x8xi32> to vector<1x1x8xi32>
    %cst_10 = arith.constant dense<2147483647> : vector<1xi32>
    %38 = vector.multi_reduction <minsi>, %37, %cst_10 [1, 2] : vector<1x1x8xi32> to vector<1xi32>
    %39 = vector.shape_cast %38 : vector<1xi32> to vector<1x1x1xi32>
    %40 = vector.extract %39[0, 0, 0] : i32 from vector<1x1x1xi32>
    %41 = tpu.iota {dimensions = array<i32: 1>} : vector<1x8x1xi32>
    %42 = vector.broadcast %40 : i32 to vector<1x8x1xi32>
    %43 = arith.cmpi eq, %41, %42 : vector<1x8x1xi32>
    %44 = arith.extui %43 : vector<1x8x1xi1> to vector<1x8x1xi32>
    %45 = arith.sitofp %44 : vector<1x8x1xi32> to vector<1x8x1xf32>
    %46 = vector.broadcast %45 : vector<1x8x1xf32> to vector<1x8x8xf32>
    %47 = arith.mulf %19, %46 : vector<1x8x8xf32>
    %cst_11 = arith.constant dense<0.000000e+00> : vector<1x8xf32>
    %48 = vector.multi_reduction <add>, %47, %cst_11 [1] : vector<1x8x8xf32> to vector<1x8xf32>
    %cst_12 = arith.constant 0.000000e+00 : f32
    %49 = vector.broadcast %cst_12 : f32 to vector<1x8xf32>
    %cst_13 = arith.constant 0x7F800000 : f32
    %c0_i32_14 = arith.constant 0 : i32
    %c3_i32_15 = arith.constant 3 : i32
    %50 = arith.addi %c0_i32_14, %c3_i32_15 : i32
    %c1_i32_16 = arith.constant 1 : i32
    %51:2 = scf.for %arg3 = %c0_i32_14 to %50 step %c1_i32_16 iter_args(%arg4 = %48, %arg5 = %49) -> (vector<1x8xf32>, vector<1x8xf32>)  : i32 {
      %cst_23 = arith.constant dense<0x7F800000> : vector<1xf32>
      %70 = vector.multi_reduction <minimumf>, %arg4, %cst_23 [1] : vector<1x8xf32> to vector<1xf32>
      %71 = vector.shape_cast %70 : vector<1xf32> to vector<1x1xf32>
      %72 = vector.broadcast %71 : vector<1x1xf32> to vector<1x8xf32>
      %73 = arith.cmpf oeq, %arg4, %72 : vector<1x8xf32>
      %c8_i32_24 = arith.constant 8 : i32
      %74 = vector.broadcast %c8_i32_24 : i32 to vector<1x8xi32>
      %75 = arith.select %73, %25, %74 : vector<1x8xi1>, vector<1x8xi32>
      %cst_25 = arith.constant dense<2147483647> : vector<1xi32>
      %76 = vector.multi_reduction <minsi>, %75, %cst_25 [1] : vector<1x8xi32> to vector<1xi32>
      %77 = vector.shape_cast %76 : vector<1xi32> to vector<1x1xi32>
      %78 = vector.broadcast %77 : vector<1x1xi32> to vector<1x8xi32>
      %79 = arith.cmpi eq, %25, %78 : vector<1x8xi32>
      %80 = arith.extui %79 : vector<1x8xi1> to vector<1x8xi32>
      %81 = arith.sitofp %80 : vector<1x8xi32> to vector<1x8xf32>
      %cst_26 = arith.constant dense<0.000000e+00> : vector<8xf32>
      %82 = vector.multi_reduction <add>, %81, %cst_26 [0] : vector<1x8xf32> to vector<8xf32>
      %83 = vector.shape_cast %82 : vector<8xf32> to vector<1x8xf32>
      %84 = arith.addf %arg5, %83 : vector<1x8xf32>
      %cst_27 = arith.constant 0.000000e+00 : f32
      %85 = vector.broadcast %cst_27 : f32 to vector<1x8xf32>
      %86 = arith.cmpf ogt, %81, %85 : vector<1x8xf32>
      %87 = vector.broadcast %cst_13 : f32 to vector<1x8xf32>
      %88 = arith.select %86, %87, %arg4 : vector<1x8xi1>, vector<1x8xf32>
      scf.yield %88, %84 : vector<1x8xf32>, vector<1x8xf32>
    }
    %52 = tpu.iota {dimensions = array<i32: 1>} : vector<1x8xi32>
    %53 = vector.broadcast %40 : i32 to vector<1x8xi32>
    %54 = arith.cmpi eq, %52, %53 : vector<1x8xi32>
    %55 = arith.extui %54 : vector<1x8xi1> to vector<1x8xi32>
    %56 = arith.sitofp %55 : vector<1x8xi32> to vector<1x8xf32>
    %cst_17 = arith.constant 0.333333343 : f32
    %57 = vector.broadcast %cst_17 : f32 to vector<1x8xf32>
    %58 = arith.mulf %51#1, %57 : vector<1x8xf32>
    %59 = tpu.iota {dimensions = array<i32: 0>} : vector<2x8xi32>
    %c0_i32_18 = arith.constant 0 : i32
    %60 = vector.broadcast %c0_i32_18 : i32 to vector<2x8xi32>
    %61 = arith.cmpi eq, %59, %60 : vector<2x8xi32>
    %62 = vector.shape_cast %56 : vector<1x8xf32> to vector<1x8xf32>
    %63 = vector.broadcast %62 : vector<1x8xf32> to vector<2x8xf32>
    %64 = vector.shape_cast %58 : vector<1x8xf32> to vector<1x8xf32>
    %65 = vector.broadcast %64 : vector<1x8xf32> to vector<2x8xf32>
    %66 = arith.select %61, %63, %65 : vector<2x8xi1>, vector<2x8xf32>
    %67 = vector.shape_cast %66 : vector<2x8xf32> to vector<1x2x8xf32>
    "tpu.trace_start"() <{level = 10 : i32, message = "bdn,bcn->bdc"}> : () -> ()
    %cst_19 = arith.constant dense<0.000000e+00> : vector<1x32x2xf32>
    %68 = tpu.matmul %0, %67, %cst_19 {dimension_numbers = #tpu.dot_dimension_numbers<[2], [2], [1], [1], [0, 0, 0, 1, 1, 1], [0], [0]>} : vector<1x32x8xf32>, vector<1x2x8xf32>, vector<1x32x2xf32> -> vector<1x32x2xf32>
    "tpu.trace_stop"() : () -> ()
    %c0_20 = arith.constant 0 : index
    %c0_21 = arith.constant 0 : index
    %c0_22 = arith.constant 0 : index
    %69 = vector.load %arg2[%c0_20, %c0_21, %c0_22] : memref<1x32x2xf32, #tpu.memory_space<vmem>>, vector<1x32x2xf32>
    tpu.vector_store %arg2[%c0_20, %c0_21, %c0_22], %68 {strides = array<i32>} : memref<1x32x2xf32, #tpu.memory_space<vmem>>, vector<1x32x2xf32>,
    return
  }
  func.func @transform_0(%arg0: i32) -> (i32, i32, i32) {
    %c0_i32 = arith.constant 0 : i32
    %c0_i32_0 = arith.constant 0 : i32
    %c0_i32_1 = arith.constant 0 : i32
    %c0_i32_2 = arith.constant 0 : i32
    return %c0_i32, %c0_i32_0, %c0_i32_1 : i32, i32, i32
  }
  func.func @transform_1(%arg0: i32) -> (i32, i32, i32) {
    %c0_i32 = arith.constant 0 : i32
    %c0_i32_0 = arith.constant 0 : i32
    %c0_i32_1 = arith.constant 0 : i32
    %c0_i32_2 = arith.constant 0 : i32
    return %c0_i32, %c0_i32_0, %c0_i32_1 : i32, i32, i32
  }
}

</mosaic_0001>

<llo_original>
// kernel: tpu_custom_call.1
$region0: #{tpu_custom_call.1}
  #allocation0 [shape = 'u32[]', space=smem, size = 0x4, offset = 0x4, fixed_abs, tag = 'smem constant byte address 0x4 - core index']
  #allocation1 [shape = 'u32[144,128]{1,0:T(1,128)}', space=vmem, size = 0x12000, scoped, tag = 'internal scratch']
  %s0 = inlined_call_operand.vmem [shape: f32[1,32,8], index: 0, kind: input, shape index: {}]
  %s1 = inlined_call_operand.vmem [shape: f32[1,32,2], index: 1, kind: output, shape index: {}]
  %s2 = sld [smem:[#allocation0]]
  $region28: #{tpu_custom_call.1} parent=0
    _
  %s4 = ssub.s32 1, %s2
  %s5 = scalar_select 0, %s4, %s2
  // Predicated region
  $region2: #{tpu_custom_call.1} parent=0 // pred_check
    _
  $region3: #{tpu_custom_call.1} parent=0 // pred_check_branch
    %7 = sbr.rel (0) target = $region5
  $region4: #{tpu_custom_call.1} parent=0 // pred_region
    _
  $region5: #{tpu_custom_call.1} parent=0 // pred_fallthru
    _
  %v8 = vld [vmem:[%s0] sm:$0xff]
  %v9 = vld [vmem:[%s0 + $0x8] sm:$0xff]
  %v10 = vld [vmem:[%s0 + $0x10] sm:$0xff]
  %v11 = vld [vmem:[%s0 + $0x18] sm:$0xff]
  %12 = vxpose.xlu0.b32.start [1/16] %v8, 128
  %13 = vxpose.xlu0.b32.cont [2/16] %v9, 128
  %14 = vxpose.xlu0.b32.cont [3/16] %v10, 128
  %15 = vxpose.xlu0.b32.cont [4/16] %v11, 128
  %16 = vxpose.xlu0.b32.cont [5/16] 0.0, 128
  %17 = vxpose.xlu0.b32.cont [6/16] 0.0, 128
  %18 = vxpose.xlu0.b32.cont [7/16] 0.0, 128
  %19 = vxpose.xlu0.b32.cont [8/16] 0.0, 128
  %20 = vxpose.xlu0.b32.cont [9/16] 0.0, 128
  %21 = vxpose.xlu0.b32.cont [10/16] 0.0, 128
  %22 = vxpose.xlu0.b32.cont [11/16] 0.0, 128
  %23 = vxpose.xlu0.b32.cont [12/16] 0.0, 128
  %24 = vxpose.xlu0.b32.cont [13/16] 0.0, 128
  %25 = vxpose.xlu0.b32.cont [14/16] 0.0, 128
  %26 = vxpose.xlu0.b32.cont [15/16] 0.0, 128
  %27 = vxpose.xlu0.b32.end [16/16] 0.0, 128
  %v28 = vpop.trf.xlu0
  %v29 = vpop.trf.xlu0
  %v30 = vpop.trf.xlu0
  %v31 = vpop.trf.xlu0
  %v32 = vpop.trf.xlu0
  %v33 = vpop.trf.xlu0
  %v34 = vpop.trf.xlu0
  %v35 = vpop.trf.xlu0
  %v36 = vpop.trf.xlu0
  %v37 = vpop.trf.xlu0
  %v38 = vpop.trf.xlu0
  %v39 = vpop.trf.xlu0
  %v40 = vpop.trf.xlu0
  %v41 = vpop.trf.xlu0
  %v42 = vpop.trf.xlu0
  %v43 = vpop.trf.xlu0
  %vm44 = vcmask 261120
  %v46 = vsel %vm44, %v28, 0
  %48 = vmatprep.subr.mxu0 0.0
  %49 = vmatpush1.xpose.msra.mxu0 %v46
  %50 = vmatprep.subr.mxu0 0.0
  %51 = vmatpush1.xpose.msra.mxu0 0.0
  %52 = vmatprep.subr.mxu0 0.0
  %53 = vmatpush1.xpose.msra.mxu0 0.0
  %54 = vmatprep.subr.mxu0 0.0
  %55 = vmatpush1.xpose.msra.mxu0 0.0
  %56 = vmatprep.subr.mxu0 0.0
  %57 = vmatpush1.xpose.msra.mxu0 0.0
  %58 = vmatprep.subr.mxu0 0.0
  %59 = vmatpush1.xpose.msra.mxu0 0.0
  %60 = vmatprep.subr.mxu0 0.0
  %61 = vmatpush1.xpose.msra.mxu0 0.0
  %62 = vmatprep.subr.mxu0 0.0
  %63 = vmatpush1.xpose.msra.mxu0 0.0
  %64 = vmatprep.subr.mxu0 0.0
  %65 = vmatpush1.xpose.msra.mxu0 0.0
  %66 = vmatprep.subr.mxu0 0.0
  %67 = vmatpush1.xpose.msra.mxu0 0.0
  %68 = vmatprep.subr.mxu0 0.0
  %69 = vmatpush1.xpose.msra.mxu0 0.0
  %70 = vmatprep.subr.mxu0 0.0
  %71 = vmatpush1.xpose.msra.mxu0 0.0
  %72 = vmatprep.subr.mxu0 0.0
  %73 = vmatpush1.xpose.msra.mxu0 0.0
  %74 = vmatprep.subr.mxu0 0.0
  %75 = vmatpush1.xpose.msra.mxu0 0.0
  %76 = vmatprep.subr.mxu0 0.0
  %77 = vmatpush1.xpose.msra.mxu0 0.0
  %78 = vmatprep.subr.mxu0 0.0
  %79 = vmatpush1.xpose.msra.mxu0 0.0
  %80 = vmatprep.subr.mxu0 0.0
  %81 = vmatpush1.xpose.msra.mxu0 0.0
  %82 = vmatprep.subr.mxu0 0.0
  %83 = vmatpush1.xpose.msra.mxu0 0.0
  %84 = vmatprep.subr.mxu0 0.0
  %85 = vmatpush1.xpose.msra.mxu0 0.0
  %86 = vmatprep.subr.mxu0 0.0
  %87 = vmatpush1.xpose.msra.mxu0 0.0
  %88 = vmatprep.subr.mxu0 0.0
  %89 = vmatpush1.xpose.msra.mxu0 0.0
  %90 = vmatprep.subr.mxu0 0.0
  %91 = vmatpush1.xpose.msra.mxu0 0.0
  %92 = vmatprep.subr.mxu0 0.0
  %93 = vmatpush1.xpose.msra.mxu0 0.0
  %94 = vmatprep.subr.mxu0 0.0
  %95 = vmatpush1.xpose.msra.mxu0 0.0
  %96 = vmatprep.subr.mxu0 0.0
  %97 = vmatpush1.xpose.msra.mxu0 0.0
  %98 = vmatprep.subr.mxu0 0.0
  %99 = vmatpush1.xpose.msra.mxu0 0.0
  %100 = vmatprep.subr.mxu0 0.0
  %101 = vmatpush1.xpose.msra.mxu0 0.0
  %102 = vmatprep.subr.mxu0 0.0
  %103 = vmatpush1.xpose.msra.mxu0 0.0
  %104 = vmatprep.subr.mxu0 0.0
  %105 = vmatpush1.xpose.msra.mxu0 0.0
  %106 = vmatprep.subr.mxu0 0.0
  %107 = vmatpush1.xpose.msra.mxu0 0.0
  %108 = vmatprep.subr.mxu0 0.0
  %109 = vmatpush1.xpose.msra.mxu0 0.0
  %110 = vmatprep.subr.mxu0 0.0
  %111 = vmatpush1.xpose.msra.mxu0 0.0
  %112 = vmatprep.mubr.f32.mxu0 0.0
  %113 = vmatmul.mubr.f32.gmra.mrb[0].mxu0 %v46
  %v114 = vpop.f32.mrb[0].mxu0
  %v115 = vadd.f32 0.0, %v114
  %v116 = vpop.f32.mrb[0].mxu0
  %117 = vdwg.mxu0
  %v118 = vlaneseq
  %v119 = vshrl.u32 %v118, 7
  %v120 = vlaneseq
  %v121 = vand.u32 %v120, 127
  %vm122 = vcmp.eq.s32.totalorder %v119, %v121
  %v123 = vsel %vm122, %v115, 0.0
  %vm124 = vcmask 64512
  %v125 = vsel %vm124, %v123, 0.0
  %126 = vadd.xlane.f32.xlu0 %v125
  %v127 = vpop.xlane.xlu0 %126
  %v129 = vlaneseq
  %v130 = vshrl.u32 %v129, 7
  %v131 = vsub.s32 %v121, %v130
  %v132 = vrot.slane %v127, %v131
  %vm133 = vcmask 1042434
  %v134 = vsel %vm133, %v132, %v132
  %vm135 = vcmask 1043459
  %v136 = vsel %vm135, %v132, %v134
  %vm137 = vcmask 1044484
  %v138 = vsel %vm137, %v132, %v136
  %vm139 = vcmask 1045509
  %v140 = vsel %vm139, %v132, %v138
  %vm141 = vcmask 1046534
  %v142 = vsel %vm141, %v132, %v140
  %vm143 = vcmask 1047559
  %v144 = vsel %vm143, %v132, %v142
  %v146 = vadd.f32 %v127, %v144
  %v147 = vmul.f32 %v115, 2.0
  %v148 = vsub.f32 %v146, %v147
  %v149 = vmax.f32 %v148, 0.0
  %v150 = vrsqrt.pop %v149
  %v151 = vmul.f32 %v149, %v150
  %vm152 = vcmp.eq.f32.partialorder %v149, inf
  %v153 = vsel %vm152, %v149, %v151
  %vm154 = vcmp.eq.f32.partialorder %v149, 0.0
  %v155 = vand.u32 %v149, 2147483648
  %v156 = vsel %vm154, %v155, %v153
  loop: start=0, step=1, limit=3
  $region6: #{tpu_custom_call.1} parent=0 // loop_pre_header
    _
  $region7: #{tpu_custom_call.1} parent=0 // loop_header
    %s158 = sphi 0, %s162
    %p159 = scmp.ge.s32.totalorder %s158, 3
    %v163 = vphi %v156, %v187
    %v164 = vphi 0.0, %v168
  $region8: #{tpu_custom_call.1} parent=0 // loop_header_branch
    %161 = sbr.rel (%p159) target = $region12
  $region9: #{tpu_custom_call.1} parent=0 // loop_body
    %v165 = vsel %vm124, %v163, inf
    %166 = vmin.xlane.f32.xlu0 %v165
    %v167 = vpop.xlane.xlu0 %166
    %v168 = vadd.f32 %v164, %v167
    %vm169 = vcmp.eq.f32.partialorder %v163, %v167
    %v170 = vsel %vm169, %v121, 8
    %v171 = vsel %vm124, %v170, 2147483647
    %v172 = vand.u32 %v171, 65535
    %v173 = vshra.s32 %v171, 16
    %v174 = vcvt.s32.f32 %v172
    %v175 = vcvt.s32.f32 %v173
    %176 = vmin.xlane.f32.xlu0 %v175
    %v177 = vpop.xlane.xlu0 %176
    %vm178 = vcmp.eq.f32.partialorder %v175, %v177
    %v179 = vsel %vm178, %v174, inf
    %180 = vmin.xlane.f32.xlu0 %v179
    %v181 = vpop.xlane.xlu0 %180
    %v182 = vcvt.f32.s32 %v181
    %v183 = vcvt.f32.s32 %v177
    %v184 = vshll.u32 %v183, 16
    %v185 = vadd.s32 %v184, %v182
    %vm186 = vcmp.eq.s32.totalorder %v121, %v185
    %v187 = vsel %vm186, inf, %v163
  $region10: #{tpu_custom_call.1} parent=0 // loop_footer
    %s162 = sadd.s32 1, %s158
  $region11: #{tpu_custom_call.1} parent=0 // loop_footer_branch
    %157 = sbr.rel target = $region7
  $region12: #{tpu_custom_call.1} parent=0 // loop_exit
    _
  %v188 = vmul.u32 %v119, 8
  %v189 = vadd.s32 %v188, %v121
  %v190 = vrot.slane %v164, 4
  %v191 = vmin.f32 %v164, %v190
  %v192 = vrot.slane %v191, 2
  %v193 = vmin.f32 %v191, %v192
  %v194 = vrot.slane %v193, 1
  %v195 = vmin.f32 %v193, %v194
  %s196 = vtos %v195
  %v197 = vstv %s196
  %vm198 = vcmp.eq.f32.partialorder %v164, %v197
  %v199 = vlaneseq
  %v200 = vshrl.u32 %v199, 7
  %v201 = vsub.s32 0, %v200
  %v202 = vrot.slane %v189, %v201
  %204 = vbcast.lane.b32.xlu0 %v202, 256
  %v205 = vpop.permute.xlu0 %204
  %v206 = vsel %vm198, %v205, 8
  %vm207 = vcmask 7168
  %v208 = vsel %vm207, %v206, 2147483647
  %v209 = vrot.slane %v208, 4
  %vm210 = vcmp.lt.s32.totalorder %v208, %v209
  %v211 = vsel %vm210, %v208, %v209
  %v212 = vrot.slane %v211, 2
  %vm213 = vcmp.lt.s32.totalorder %v211, %v212
  %v214 = vsel %vm213, %v211, %v212
  %v215 = vrot.slane %v214, 1
  %vm216 = vcmp.lt.s32.totalorder %v214, %v215
  %v217 = vsel %vm216, %v214, %v215
  %s218 = vtos %v217
  %v219 = vstv %s218
  %vm220 = vcmp.eq.s32.totalorder %v119, %v219
  %v221 = vsel %vm220, 1, 0
  %v222 = vcvt.s32.f32 %v221
  %v223 = vmul.f32 %v156, %v222
  %v224 = vsel %vm124, %v223, 0.0
  %v225 = vrot.slane %v224, 4
  %v226 = vadd.f32 %v224, %v225
  %v227 = vrot.slane %v226, 2
  %v228 = vadd.f32 %v226, %v227
  %v229 = vrot.slane %v228, 1
  %v230 = vadd.f32 %v228, %v229
  loop: start=0, step=1, limit=3
  $region13: #{tpu_custom_call.1} parent=0 // loop_pre_header
    _
  $region14: #{tpu_custom_call.1} parent=0 // loop_header
    %s232 = sphi 0, %s236
    %p233 = scmp.ge.s32.totalorder %s232, 3
    %v237 = vphi %v230, %v265
    %v238 = vphi 0.0, %v263
  $region15: #{tpu_custom_call.1} parent=0 // loop_header_branch
    %235 = sbr.rel (%p233) target = $region19
  $region16: #{tpu_custom_call.1} parent=0 // loop_body
    %v239 = vsel %vm124, %v237, inf
    %240 = vmin.xlane.f32.xlu0 %v239
    %v241 = vpop.xlane.xlu0 %240
    %vm242 = vcmp.eq.f32.partialorder %v237, %v241
    %v243 = vsel %vm242, %v121, 8
    %v244 = vsel %vm124, %v243, 2147483647
    %v245 = vand.u32 %v244, 65535
    %v246 = vshra.s32 %v244, 16
    %v247 = vcvt.s32.f32 %v245
    %v248 = vcvt.s32.f32 %v246
    %249 = vmin.xlane.f32.xlu0 %v248
    %v250 = vpop.xlane.xlu0 %249
    %vm251 = vcmp.eq.f32.partialorder %v248, %v250
    %v252 = vsel %vm251, %v247, inf
    %253 = vmin.xlane.f32.xlu0 %v252
    %v254 = vpop.xlane.xlu0 %253
    %v255 = vcvt.f32.s32 %v254
    %v256 = vcvt.f32.s32 %v250
    %v257 = vshll.u32 %v256, 16
    %v258 = vadd.s32 %v257, %v255
    %vm259 = vcmp.eq.s32.totalorder %v121, %v258
    %v260 = vsel %vm259, 1, 0
    %v261 = vcvt.s32.f32 %v260
    %v262 = vadd.f32 %v261, 0.0
    %v263 = vadd.f32 %v238, %v262
    %vm264 = vcmp.gt.f32.partialorder %v261, 0.0
    %v265 = vsel %vm264, inf, %v237
  $region17: #{tpu_custom_call.1} parent=0 // loop_footer
    %s236 = sadd.s32 1, %s232
  $region18: #{tpu_custom_call.1} parent=0 // loop_footer_branch
    %231 = sbr.rel target = $region14
  $region19: #{tpu_custom_call.1} parent=0 // loop_exit
    _
  %vm266 = vcmp.eq.s32.totalorder %v121, %v219
  %v267 = vsel %vm266, 1, 0
  %v268 = vcvt.s32.f32 %v267
  %v269 = vmul.f32 %v238, 0.33333334
  %vm270 = vcmp.eq.s32.totalorder %v119, 0
  %v271 = vsel %vm270, %v268, %v269
  %v273 = vsel %vm124, %v8, 0
  %v276 = vsel %vm124, %v9, 0
  %v279 = vsel %vm124, %v10, 0
  %v282 = vsel %vm124, %v11, 0
  %v285 = vsel %vm124, %v271, 0
  %287 = vmatprep.subr.mxu0 0.0
  %288 = vmatpush1.xpose.msra.mxu0 %v285
  %289 = vmatprep.subr.mxu0 0.0
  %290 = vmatpush1.xpose.msra.mxu0 0.0
  %291 = vmatprep.subr.mxu0 0.0
  %292 = vmatpush1.xpose.msra.mxu0 0.0
  %293 = vmatprep.subr.mxu0 0.0
  %294 = vmatpush1.xpose.msra.mxu0 0.0
  %295 = vmatprep.subr.mxu0 0.0
  %296 = vmatpush1.xpose.msra.mxu0 0.0
  %297 = vmatprep.subr.mxu0 0.0
  %298 = vmatpush1.xpose.msra.mxu0 0.0
  %299 = vmatprep.subr.mxu0 0.0
  %300 = vmatpush1.xpose.msra.mxu0 0.0
  %301 = vmatprep.subr.mxu0 0.0
  %302 = vmatpush1.xpose.msra.mxu0 0.0
  %303 = vmatprep.subr.mxu0 0.0
  %304 = vmatpush1.xpose.msra.mxu0 0.0
  %305 = vmatprep.subr.mxu0 0.0
  %306 = vmatpush1.xpose.msra.mxu0 0.0
  %307 = vmatprep.subr.mxu0 0.0
  %308 = vmatpush1.xpose.msra.mxu0 0.0
  %309 = vmatprep.subr.mxu0 0.0
  %310 = vmatpush1.xpose.msra.mxu0 0.0
  %311 = vmatprep.subr.mxu0 0.0
  %312 = vmatpush1.xpose.msra.mxu0 0.0
  %313 = vmatprep.subr.mxu0 0.0
  %314 = vmatpush1.xpose.msra.mxu0 0.0
  %315 = vmatprep.subr.mxu0 0.0
  %316 = vmatpush1.xpose.msra.mxu0 0.0
  %317 = vmatprep.subr.mxu0 0.0
  %318 = vmatpush1.xpose.msra.mxu0 0.0
  %319 = vmatprep.subr.mxu0 0.0
  %320 = vmatpush1.xpose.msra.mxu0 0.0
  %321 = vmatprep.subr.mxu0 0.0
  %322 = vmatpush1.xpose.msra.mxu0 0.0
  %323 = vmatprep.subr.mxu0 0.0
  %324 = vmatpush1.xpose.msra.mxu0 0.0
  %325 = vmatprep.subr.mxu0 0.0
  %326 = vmatpush1.xpose.msra.mxu0 0.0
  %327 = vmatprep.subr.mxu0 0.0
  %328 = vmatpush1.xpose.msra.mxu0 0.0
  %329 = vmatprep.subr.mxu0 0.0
  %330 = vmatpush1.xpose.msra.mxu0 0.0
  %331 = vmatprep.subr.mxu0 0.0
  %332 = vmatpush1.xpose.msra.mxu0 0.0
  %333 = vmatprep.subr.mxu0 0.0
  %334 = vmatpush1.xpose.msra.mxu0 0.0
  %335 = vmatprep.subr.mxu0 0.0
  %336 = vmatpush1.xpose.msra.mxu0 0.0
  %337 = vmatprep.subr.mxu0 0.0
  %338 = vmatpush1.xpose.msra.mxu0 0.0
  %339 = vmatprep.subr.mxu0 0.0
  %340 = vmatpush1.xpose.msra.mxu0 0.0
  %341 = vmatprep.subr.mxu0 0.0
  %342 = vmatpush1.xpose.msra.mxu0 0.0
  %343 = vmatprep.subr.mxu0 0.0
  %344 = vmatpush1.xpose.msra.mxu0 0.0
  %345 = vmatprep.subr.mxu0 0.0
  %346 = vmatpush1.xpose.msra.mxu0 0.0
  %347 = vmatprep.subr.mxu0 0.0
  %348 = vmatpush1.xpose.msra.mxu0 0.0
  %349 = vmatprep.subr.mxu0 0.0
  %350 = vmatpush1.xpose.msra.mxu0 0.0
  %351 = vmatprep.mubr.f32.mxu0 0.0
  %352 = vmatmul.mubr.f32.gmra.mrb[0].mxu0 %v273
  %v353 = vpop.f32.mrb[0].mxu0
  %v354 = vadd.f32 0.0, %v353
  %v355 = vpop.f32.mrb[0].mxu0
  %356 = vmatprep.mubr.f32.mxu0 0.0
  %357 = vmatmul.mubr.f32.gmra.mrb[0].mxu0 %v276
  %v358 = vpop.f32.mrb[0].mxu0
  %v359 = vadd.f32 0.0, %v358
  %v360 = vpop.f32.mrb[0].mxu0
  %361 = vmatprep.mubr.f32.mxu0 0.0
  %362 = vmatmul.mubr.f32.gmra.mrb[0].mxu0 %v279
  %v363 = vpop.f32.mrb[0].mxu0
  %v364 = vadd.f32 0.0, %v363
  %v365 = vpop.f32.mrb[0].mxu0
  %366 = vmatprep.mubr.f32.mxu0 0.0
  %367 = vmatmul.mubr.f32.gmra.mrb[0].mxu0 %v282
  %v368 = vpop.f32.mrb[0].mxu0
  %v369 = vadd.f32 0.0, %v368
  %v370 = vpop.f32.mrb[0].mxu0
  %371 = vdwg.mxu0
  %vm372 = vcmask 15360
  %373 = vst.msk [vmem:[%s1] sm:$0xff] %vm372, %v354
  %374 = vst.msk [vmem:[%s1 + $0x8] sm:$0xff] %vm372, %v359
  %375 = vst.msk [vmem:[%s1 + $0x10] sm:$0xff] %vm372, %v364
  %376 = vst.msk [vmem:[%s1 + $0x18] sm:$0xff] %vm372, %v369
  // Predicated region
  $region20: #{tpu_custom_call.1} parent=0 // pred_check
    _
  $region21: #{tpu_custom_call.1} parent=0 // pred_check_branch
    %378 = sbr.rel (0) target = $region23
  $region22: #{tpu_custom_call.1} parent=0 // pred_region
    _
  $region23: #{tpu_custom_call.1} parent=0 // pred_fallthru
    _
  // Predicated region
  $region24: #{tpu_custom_call.1} parent=0 // pred_check
    _
  $region25: #{tpu_custom_call.1} parent=0 // pred_check_branch
    %380 = sbr.rel (0) target = $region27
  $region26: #{tpu_custom_call.1} parent=0 // pred_region
    _
  $region27: #{tpu_custom_call.1} parent=0 // pred_fallthru
    _

</llo_original>
